<compile_context>
chip_gen: v6e
topology: v6e:2x2x1
jax: 0.10.0
libtpu: 0.0.40
codegen_flags: <defaults>
</compile_context>

<pallas_src>
from functools import partial

import jax
import jax.numpy as jnp
from jax.experimental import pallas as pl
from jax.experimental.pallas import tpu as pltpu


def _round_up(n, m):
    return (n + m - 1) // m * m


def particle_block_kernel(x_ref, w1_ref, b1_ref, w2_ref, b2_ref, o_ref):
    # One grid step == one block of particles.  Both matmuls are lane-dense,
    # full-width MXU ops; the bias adds broadcast over batch rows on the VPU.
    h = jnp.dot(x_ref[...], w1_ref[...], preferred_element_type=jnp.float32)
    h = jnp.maximum(h + b1_ref[...], 0.0)
    out = jnp.dot(h, w2_ref[...], preferred_element_type=jnp.float32)
    o_ref[...] = (out + b2_ref[...]).astype(o_ref.dtype)


def pack_particle_params(w1, b1, w2, b2, *, num_blocks=2):
    """One-time layout packing of the ensemble parameters (keep the result
    resident; do NOT redo this per forward call).

    w1: [P, in, hidden]   b1: [P, 1, hidden]
    w2: [P, hidden, out]  b2: [P, 1, out]
    Returns:
      w1_all : [in, P*Hp]                layer-1 weights, particles concat on N
      b1_all : [1,  P*Hp]
      w2_bd  : [G, PB*Hp, PB*Npad]       per-block block-diagonal layer-2 weights
      b2_all : [G, 1,     PB*Npad]
    where G = num_blocks, PB = P // G, Hp/Npad are zero-padded (lane-aligned)
    hidden/output widths.  Zero padding contributes exactly 0 through ReLU and
    the second matmul, so the math is unchanged.
    """
    P, K, H = w1.shape
    out_f = w2.shape[2]
    assert P % num_blocks == 0, "num_blocks must divide the particle count"
    PB = P // num_blocks
    # Pad hidden only if a block of PB particles would not be lane-aligned.
    Hp = H if (PB * H) % 128 == 0 else _round_up(H, 128)
    Npad = _round_up(out_f, 128)

    w1p = jnp.pad(w1, ((0, 0), (0, 0), (0, Hp - H)))               # [P, K, Hp]
    b1p = jnp.pad(b1, ((0, 0), (0, 0), (0, Hp - H)))               # [P, 1, Hp]
    w2p = jnp.pad(w2, ((0, 0), (0, Hp - H), (0, Npad - out_f)))    # [P, Hp, Npad]
    b2p = jnp.pad(b2, ((0, 0), (0, 0), (0, Npad - out_f)))         # [P, 1, Npad]

    # Layer 1: concat particles along the output-feature axis -> [K, P*Hp].
    w1_all = jnp.transpose(w1p, (1, 0, 2)).reshape(K, P * Hp)
    b1_all = b1p.reshape(1, P * Hp)

    # Layer 2: one dense block-diagonal [PB*Hp, PB*Npad] matrix per grid step,
    # so layer 2 is a single matmul with a lane-dense output.
    w2_g = w2p.reshape(num_blocks, PB, Hp, Npad)
    eye = jnp.eye(PB, dtype=w2p.dtype)[None, :, None, :, None]      # [1,PB,1,PB,1]
    w2_bd = (w2_g[:, :, :, None, :] * eye).reshape(num_blocks, PB * Hp, PB * Npad)
    b2_all = b2p.reshape(num_blocks, 1, PB * Npad)
    return w1_all, b1_all, w2_bd, b2_all


@partial(jax.jit, static_argnames=("num_particles", "out_features"))
def particle_ensemble_forward(x, w1_all, b1_all, w2_bd, b2_all, *,
                              num_particles, out_features):
    """Evaluate all particles' MLPs on a shared input X with one pallas_call.

    x packed params come from pack_particle_params; returns [P, batch, out].
    """
    batch, K = x.shape
    G, PBH, PBN = w2_bd.shape
    P = num_particles
    PB = P // G
    Npad = PBN // PB

    # Batch only needs 8-sublane alignment; pad only if actually required.
    M = _round_up(batch, 8)
    xp = x if M == batch else jnp.pad(x, ((0, M - batch), (0, 0)))

    out = pl.pallas_call(
        particle_block_kernel,
        out_shape=jax.ShapeDtypeStruct((M, G * PBN), jnp.float32),
        grid=(G,),
        in_specs=[
            # Shared X: same block every grid step (pipeliner skips re-fetch).
            pl.BlockSpec((M, K), lambda g: (0, 0)),
            # Per-block layer-1 weight columns / bias.
            pl.BlockSpec((K, PBH), lambda g: (0, g)),
            pl.BlockSpec((1, PBH), lambda g: (0, g)),
            # Per-block block-diagonal layer-2 weight / bias (block dim squeezed).
            pl.BlockSpec((None, PBH, PBN), lambda g: (g, 0, 0)),
            pl.BlockSpec((None, 1, PBN), lambda g: (g, 0, 0)),
        ],
        out_specs=pl.BlockSpec((M, PBN), lambda g: (0, g)),
        compiler_params=pltpu.CompilerParams(
            # Particle blocks are independent: shard across the two TCs on v7x.
            dimension_semantics=("parallel",),
        ),
    )(xp, w1_all, b1_all, w2_bd, b2_all)

    # [M, G*PB*Npad] -> [P, batch, out_features]
    out = out.reshape(M, G, PB, Npad)
    out = jnp.transpose(out, (1, 2, 0, 3)).reshape(P, M, Npad)
    return out[:, :batch, :out_features]


def init_particle_params(key, num_particles, in_features, hidden, out_features):
    """Mimics Particle.__init__ with restore=False for an ensemble: every
    parameter of each copied inner model is overwritten by torch.randn_like(p).
    Weights stored as [in, out] (PyTorch Linear keeps [out, in])."""
    k1, k2, k3, k4 = jax.random.split(key, 4)
    w1 = jax.random.normal(k1, (num_particles, in_features, hidden), dtype=jnp.float32)
    b1 = jax.random.normal(k2, (num_particles, 1, hidden), dtype=jnp.float32)
    w2 = jax.random.normal(k3, (num_particles, hidden, out_features), dtype=jnp.float32)
    b2 = jax.random.normal(k4, (num_particles, 1, out_features), dtype=jnp.float32)
    return w1, b1, w2, b2


if __name__ == "__main__":
    key = jax.random.PRNGKey(0)
    k_x, k_p = jax.random.split(key)

    num_particles = 8
    batch, in_features, hidden, out_features = 128, 16, 32, 10

    x = jax.random.normal(k_x, (batch, in_features), dtype=jnp.float32)
    w1, b1, w2, b2 = init_particle_params(
        k_p, num_particles, in_features, hidden, out_features)

    # One-time layout packing (pre-padded, block-diagonal); reused every call.
    packed = pack_particle_params(w1, b1, w2, b2, num_blocks=2)

    out = particle_ensemble_forward(
        x, *packed, num_particles=num_particles, out_features=out_features)
    out = jax.block_until_ready(out)

    # Reference check in plain JAX (same math, same params, per particle).
    h_ref = jnp.maximum(jnp.einsum("bk,pkh->pbh", x, w1) + b1, 0.0)
    ref = jnp.einsum("pbh,phn->pbn", h_ref, w2) + b2

    assert out.shape == (num_particles, batch, out_features)
    assert jnp.allclose(out, ref, atol=1e-3, rtol=1e-3)

    print("KERNEL_OK")
</pallas_src>

<mosaic_0001>
module attributes {stable_mosaic.version = 11 : i64} {
  func.func @particle_block_kernel(%arg0: i32, %arg1: memref<128x16xf32, #tpu.memory_space<vmem>>, %arg2: memref<16x128xf32, #tpu.memory_space<vmem>>, %arg3: memref<1x128xf32, #tpu.memory_space<vmem>>, %arg4: memref<1x128x512xf32, #tpu.memory_space<vmem>>, %arg5: memref<1x1x512xf32, #tpu.memory_space<vmem>>, %arg6: memref<128x512xf32, #tpu.memory_space<vmem>>) attributes {dimension_semantics = [#tpu.dimension_semantics<parallel>], iteration_bounds = array<i64: 2>, scalar_prefetch = 0 : i64, scratch_operands = 0 : i64, tpu.core_type = #tpu.core_type<tc>, window_params = [{pipeline_mode = #tpu.pipeline_mode<synchronous>, transform_indices = @transform_0, window_bounds = array<i64: 128, 16>}, {transform_indices = @transform_1, window_bounds = array<i64: 16, 128>}, {transform_indices = @transform_2, window_bounds = array<i64: 1, 128>}, {transform_indices = @transform_3, window_bounds = array<i64: 1, 128, 512>}, {transform_indices = @transform_4, window_bounds = array<i64: 1, 1, 512>}, {transform_indices = @transform_5, window_bounds = array<i64: 128, 512>}]} {
    %c0 = arith.constant 0 : index
    %c0_0 = arith.constant 0 : index
    %0 = vector.load %arg1[%c0, %c0_0] : memref<128x16xf32, #tpu.memory_space<vmem>>, vector<128x16xf32>
    %c0_1 = arith.constant 0 : index
    %c0_2 = arith.constant 0 : index
    %1 = vector.load %arg2[%c0_1, %c0_2] : memref<16x128xf32, #tpu.memory_space<vmem>>, vector<16x128xf32>
    %cst = arith.constant dense<0.000000e+00> : vector<128x128xf32>
    %2 = tpu.matmul %0, %1, %cst {dimension_numbers = #tpu.dot_dimension_numbers<[1], [0], [0], [1], [0, 0, 1, 1], [], []>} : vector<128x16xf32>, vector<16x128xf32>, vector<128x128xf32> -> vector<128x128xf32>
    %c0_3 = arith.constant 0 : index
    %c0_4 = arith.constant 0 : index
    %3 = vector.load %arg3[%c0_3, %c0_4] : memref<1x128xf32, #tpu.memory_space<vmem>>, vector<1x128xf32>
    %4 = vector.broadcast %3 : vector<1x128xf32> to vector<128x128xf32>
    %5 = arith.addf %2, %4 : vector<128x128xf32>
    %cst_5 = arith.constant 0.000000e+00 : f32
    %6 = vector.broadcast %cst_5 : f32 to vector<128x128xf32>
    %7 = arith.maximumf %5, %6 : vector<128x128xf32>
    %c0_6 = arith.constant 0 : index
    %c0_7 = arith.constant 0 : index
    %c0_8 = arith.constant 0 : index
    %8 = vector.load %arg4[%c0_6, %c0_7, %c0_8] : memref<1x128x512xf32, #tpu.memory_space<vmem>>, vector<1x128x512xf32>
    %9 = vector.shape_cast %8 : vector<1x128x512xf32> to vector<128x512xf32>
    %cst_9 = arith.constant dense<0.000000e+00> : vector<128x512xf32>
    %10 = tpu.matmul %7, %9, %cst_9 {dimension_numbers = #tpu.dot_dimension_numbers<[1], [0], [0], [1], [0, 0, 1, 1], [], []>} : vector<128x128xf32>, vector<128x512xf32>, vector<128x512xf32> -> vector<128x512xf32>
    %c0_10 = arith.constant 0 : index
    %c0_11 = arith.constant 0 : index
    %c0_12 = arith.constant 0 : index
    %11 = vector.load %arg5[%c0_10, %c0_11, %c0_12] : memref<1x1x512xf32, #tpu.memory_space<vmem>>, vector<1x1x512xf32>
    %12 = vector.shape_cast %11 : vector<1x1x512xf32> to vector<1x512xf32>
    %13 = vector.broadcast %12 : vector<1x512xf32> to vector<128x512xf32>
    %14 = arith.addf %10, %13 : vector<128x512xf32>
    %c0_13 = arith.constant 0 : index
    %c0_14 = arith.constant 0 : index
    %15 = vector.load %arg6[%c0_13, %c0_14] : memref<128x512xf32, #tpu.memory_space<vmem>>, vector<128x512xf32>
    tpu.vector_store %arg6[%c0_13, %c0_14], %14 {strides = array<i32>} : memref<128x512xf32, #tpu.memory_space<vmem>>, vector<128x512xf32>,
    return
  }
  func.func @transform_0(%arg0: i32) -> (i32, i32) {
    %c0_i32 = arith.constant 0 : i32
    %c0_i32_0 = arith.constant 0 : i32
    %c0_i32_1 = arith.constant 0 : i32
    return %c0_i32, %c0_i32_0 : i32, i32
  }
  func.func @transform_1(%arg0: i32) -> (i32, i32) {
    %c0_i32 = arith.constant 0 : i32
    %c0_i32_0 = arith.constant 0 : i32
    return %c0_i32, %arg0 : i32, i32
  }
  func.func @transform_2(%arg0: i32) -> (i32, i32) {
    %c0_i32 = arith.constant 0 : i32
    %c0_i32_0 = arith.constant 0 : i32
    return %c0_i32, %arg0 : i32, i32
  }
  func.func @transform_3(%arg0: i32) -> (i32, i32, i32) {
    %c0_i32 = arith.constant 0 : i32
    %c0_i32_0 = arith.constant 0 : i32
    %c0_i32_1 = arith.constant 0 : i32
    return %arg0, %c0_i32, %c0_i32_0 : i32, i32, i32
  }
  func.func @transform_4(%arg0: i32) -> (i32, i32, i32) {
    %c0_i32 = arith.constant 0 : i32
    %c0_i32_0 = arith.constant 0 : i32
    %c0_i32_1 = arith.constant 0 : i32
    return %arg0, %c0_i32, %c0_i32_0 : i32, i32, i32
  }
  func.func @transform_5(%arg0: i32) -> (i32, i32) {
    %c0_i32 = arith.constant 0 : i32
    %c0_i32_0 = arith.constant 0 : i32
    return %c0_i32, %arg0 : i32, i32
  }
}

</mosaic_0001>

<llo_original>
// kernel: particle_ensemble_forward.1
$region0: #{particle_ensemble_forward.1}
  #allocation0 [shape = 'u32[]', space=smem, size = 0x4, offset = 0x4, fixed_abs, tag = 'smem constant byte address 0x4 - core index']
  #allocation1 [shape = 'u32[144,128]{1,0:T(1,128)}', space=vmem, size = 0x12000, scoped, tag = 'internal scratch']
  %s0 = inlined_call_operand.vmem [shape: f32[128,16], index: 0, kind: input, shape index: {}]
  %s1 = inlined_call_operand.vmem [shape: f32[16,256], index: 1, kind: input, shape index: {}]
  %s2 = inlined_call_operand.vmem [shape: f32[1,256], index: 2, kind: input, shape index: {}]
  %s3 = inlined_call_operand.hbm [shape: f32[2,128,512], index: 3, kind: input, shape index: {}]
  %s4 = inlined_call_operand.vmem [shape: f32[2,1,512], index: 4, kind: input, shape index: {}]
  %s5 = inlined_call_operand.vmem [shape: f32[128,1024], index: 5, kind: output, shape index: {}]
  %s6 = sld [smem:[#allocation0]]
  $region114: #{particle_ensemble_forward.1} parent=0
    _
  %s8 = ssub.s32 1, %s6
  %s9 = scalar_select 0, %s8, %s6
  $region1: #{particle_ensemble_forward.1} parent=0
    #allocation2 [shape = 'u8[16384]{0}', space=vmem, size = 0x4000, scoped, tag = 'input window, operand 1']
    #allocation3 [shape = 'u8[524288]{0}', space=vmem, size = 0x80000, scoped, tag = 'input window, operand 3']
    #allocation4 [shape = 's32[2]{0}', space=sflag, size = 0x8, scoped, tag = 'scoped memory for particle_ensemble_forward.1']
    #allocation5 [shape = 'u8[524288]{0}', space=vmem, size = 0x80000, scoped, tag = 'output window, operand 0']
    %10 = vsyncpa [#allocation4], 0
    %s11 = scalar_lea.sflag [#allocation4], 1
    %12 = vsyncpa %s11, 0
    loop: start=0, step=1, limit=4
    $region2: #{particle_ensemble_forward.1} parent=1 // loop_pre_header
      _
    $region3: #{particle_ensemble_forward.1} parent=1 // loop_header
      %s14 = sphi 0, %s18
      %p15 = scmp.ge.s32.totalorder %s14, 4
      %s22 = sphi 0, %s22
      %s24 = sphi 0, %s22
      %s25 = sphi 0, %s24
      %s39 = sphi 0, %s25
      %s45 = sphi 0, %s47
      %s48 = sphi 0, %s45
      %s49 = sphi 0, %s48
      %s65 = sphi 0, %s49
      %s71 = sphi 0, %s73
      %s74 = sphi 0, %s71
      %s75 = sphi 0, %s74
      %s91 = sphi 0, %s75
      %s97 = sphi 0, %s99
      %s100 = sphi 0, %s97
      %s101 = sphi 0, %s100
      %s117 = sphi 0, %s101
      %s123 = sphi 0, %s125
      %s126 = sphi 0, %s123
      %s127 = sphi 0, %s126
      %s143 = sphi 0, %s127
      %s149 = sphi 0, %s151
      %s152 = sphi 0, %s149
      %s153 = sphi 0, %s152
      %s169 = sphi 0, %s153
    $region4: #{particle_ensemble_forward.1} parent=1 // loop_header_branch
      %17 = sbr.rel (%p15) target = $region8
    $region5: #{particle_ensemble_forward.1} parent=1 // loop_body
      %s19 = ssub.s32 %s14, 1
      %s20 = ssub.s32 %s14, 2
      %s21 = sadd.s32 %s14, 1
      %s23 = sadd.s32 %s22, 1
      %p26 = scmp.eq.s32.totalorder %s14, 1
      %p27 = scmp.ne.s32.totalorder %s22, %s24
      %p28 = scmp.eq.s32.totalorder %s14, 0
      %p29 = por %p27, %p28
      %p30 = scmp.ne.s32.totalorder %s22, %s24
      %p31 = scmp.eq.s32.totalorder %s19, 1
      %p32 = por %p30, %p31
      %p33 = scmp.ne.s32.totalorder %s24, %s25
      %p34 = scmp.eq.s32.totalorder %s19, 0
      %p35 = por %p33, %p34
      %p36 = scmp.ne.s32.totalorder %s24, %s25
      %p37 = scmp.eq.s32.totalorder %s20, 1
      %p38 = por %p36, %p37
      %p40 = scmp.ne.s32.totalorder %s25, %s39
      %p41 = scmp.eq.s32.totalorder %s20, 0
      %p42 = por %p40, %p41
      %s43 = ssub.s32 %s14, %s21
      %p44 = scmp.eq.s32.totalorder %s43, 0
      %s46 = sadd.s32 %s45, 1
      %s47 = scalar_select %p44, %s45, %s46
      %p50 = pneg %p44
      %p51 = scmp.eq.s32.totalorder %s14, 1
      %p52 = por %p50, %p51
      %p53 = scmp.ne.s32.totalorder %s45, %s48
      %p54 = scmp.eq.s32.totalorder %s14, 0
      %p55 = por %p53, %p54
      %p56 = scmp.ne.s32.totalorder %s45, %s48
      %p57 = scmp.eq.s32.totalorder %s19, 1
      %p58 = por %p56, %p57
      %p59 = scmp.ne.s32.totalorder %s48, %s49
      %p60 = scmp.eq.s32.totalorder %s19, 0
      %p61 = por %p59, %p60
      %p62 = scmp.ne.s32.totalorder %s48, %s49
      %p63 = scmp.eq.s32.totalorder %s20, 1
      %p64 = por %p62, %p63
      %p66 = scmp.ne.s32.totalorder %s49, %s65
      %p67 = scmp.eq.s32.totalorder %s20, 0
      %p68 = por %p66, %p67
      %s69 = ssub.s32 %s14, %s21
      %p70 = scmp.eq.s32.totalorder %s69, 0
      %s72 = sadd.s32 %s71, 1
      %s73 = scalar_select %p70, %s71, %s72
      %p76 = pneg %p70
      %p77 = scmp.eq.s32.totalorder %s14, 1
      %p78 = por %p76, %p77
      %p79 = scmp.ne.s32.totalorder %s71, %s74
      %p80 = scmp.eq.s32.totalorder %s14, 0
      %p81 = por %p79, %p80
      %p82 = scmp.ne.s32.totalorder %s71, %s74
      %p83 = scmp.eq.s32.totalorder %s19, 1
      %p84 = por %p82, %p83
      %p85 = scmp.ne.s32.totalorder %s74, %s75
      %p86 = scmp.eq.s32.totalorder %s19, 0
      %p87 = por %p85, %p86
      %p88 = scmp.ne.s32.totalorder %s74, %s75
      %p89 = scmp.eq.s32.totalorder %s20, 1
      %p90 = por %p88, %p89
      %p92 = scmp.ne.s32.totalorder %s75, %s91
      %p93 = scmp.eq.s32.totalorder %s20, 0
      %p94 = por %p92, %p93
      %s95 = ssub.s32 %s14, %s21
      %p96 = scmp.eq.s32.totalorder %s95, 0
      %s98 = sadd.s32 %s97, 1
      %s99 = scalar_select %p96, %s97, %s98
      %p102 = pneg %p96
      %p103 = scmp.eq.s32.totalorder %s14, 1
      %p104 = por %p102, %p103
      %p105 = scmp.ne.s32.totalorder %s97, %s100
      %p106 = scmp.eq.s32.totalorder %s14, 0
      %p107 = por %p105, %p106
      %p108 = scmp.ne.s32.totalorder %s97, %s100
      %p109 = scmp.eq.s32.totalorder %s19, 1
      %p110 = por %p108, %p109
      %p111 = scmp.ne.s32.totalorder %s100, %s101
      %p112 = scmp.eq.s32.totalorder %s19, 0
      %p113 = por %p111, %p112
      %p114 = scmp.ne.s32.totalorder %s100, %s101
      %p115 = scmp.eq.s32.totalorder %s20, 1
      %p116 = por %p114, %p115
      %p118 = scmp.ne.s32.totalorder %s101, %s117
      %p119 = scmp.eq.s32.totalorder %s20, 0
      %p120 = por %p118, %p119
      %s121 = ssub.s32 %s14, %s21
      %p122 = scmp.eq.s32.totalorder %s121, 0
      %s124 = sadd.s32 %s123, 1
      %s125 = scalar_select %p122, %s123, %s124
      %p128 = pneg %p122
      %p129 = scmp.eq.s32.totalorder %s14, 1
      %p130 = por %p128, %p129
      %p131 = scmp.ne.s32.totalorder %s123, %s126
      %p132 = scmp.eq.s32.totalorder %s14, 0
      %p133 = por %p131, %p132
      %p134 = scmp.ne.s32.totalorder %s123, %s126
      %p135 = scmp.eq.s32.totalorder %s19, 1
      %p136 = por %p134, %p135
      %p137 = scmp.ne.s32.totalorder %s126, %s127
      %p138 = scmp.eq.s32.totalorder %s19, 0
      %p139 = por %p137, %p138
      %p140 = scmp.ne.s32.totalorder %s126, %s127
      %p141 = scmp.eq.s32.totalorder %s20, 1
      %p142 = por %p140, %p141
      %p144 = scmp.ne.s32.totalorder %s127, %s143
      %p145 = scmp.eq.s32.totalorder %s20, 0
      %p146 = por %p144, %p145
      %s147 = ssub.s32 %s14, %s21
      %p148 = scmp.eq.s32.totalorder %s147, 0
      %s150 = sadd.s32 %s149, 1
      %s151 = scalar_select %p148, %s149, %s150
      %p154 = pneg %p148
      %p155 = scmp.eq.s32.totalorder %s14, 1
      %p156 = por %p154, %p155
      %p157 = scmp.ne.s32.totalorder %s149, %s152
      %p158 = scmp.eq.s32.totalorder %s14, 0
      %p159 = por %p157, %p158
      %p160 = scmp.ne.s32.totalorder %s149, %s152
      %p161 = scmp.eq.s32.totalorder %s19, 1
      %p162 = por %p160, %p161
      %p163 = scmp.ne.s32.totalorder %s152, %s153
      %p164 = scmp.eq.s32.totalorder %s19, 0
      %p165 = por %p163, %p164
      %p166 = scmp.ne.s32.totalorder %s152, %s153
      %p167 = scmp.eq.s32.totalorder %s20, 1
      %p168 = por %p166, %p167
      %p170 = scmp.ne.s32.totalorder %s153, %s169
      %p171 = scmp.eq.s32.totalorder %s20, 0
      %p172 = por %p170, %p171
      %p173 = scmp.le.s32.totalorder 1, %s14
      %p174 = scmp.lt.s32.totalorder %s14, 3
      %p175 = pnand %p173, %p174
      %p176 = pneg %p175
      // Predicated region
      $region9: #{particle_ensemble_forward.1} parent=5 // pred_check
        _
      $region10: #{particle_ensemble_forward.1} parent=5 // pred_check_branch
        %178 = sbr.rel (%p175) target = $region12
      $region11: #{particle_ensemble_forward.1} parent=5 // pred_region
        %s179 = ssub.s32 %s14, 1
        // Predicated region
        $region13: #{particle_ensemble_forward.1} parent=11 // pred_check
          %p180 = pneg %p35
        $region14: #{particle_ensemble_forward.1} parent=11 // pred_check_branch
          %182 = sbr.rel (%p180) target = $region16
        $region15: #{particle_ensemble_forward.1} parent=11 // pred_region
          _
        $region16: #{particle_ensemble_forward.1} parent=11 // pred_fallthru
          _
      $region12: #{particle_ensemble_forward.1} parent=5 // pred_fallthru
        _
      %p183 = scmp.lt.s32.totalorder %s14, 2
      // Predicated region
      $region17: #{particle_ensemble_forward.1} parent=5 // pred_check
        %p184 = pneg %p183
      $region18: #{particle_ensemble_forward.1} parent=5 // pred_check_branch
        %186 = sbr.rel (%p184) target = $region20
      $region19: #{particle_ensemble_forward.1} parent=5 // pred_region
        // Predicated region
        $region21: #{particle_ensemble_forward.1} parent=19 // pred_check
          %p187 = pneg %p55
        $region22: #{particle_ensemble_forward.1} parent=19 // pred_check_branch
          %189 = sbr.rel (%p187) target = $region24
        $region23: #{particle_ensemble_forward.1} parent=19 // pred_region
          %s190 = sand.u32 %s45, 1
          %s191 = sand.u32 %s45, 1
          %s192 = smul.addr %s191, 16
          %s193 = scalar_lea.vmem [#allocation2], %s192
          %s194 = smul.addr %s14, 8
          %s195 = scalar_lea.vmem %s1, %s194
          // Predicated region
          $region25: #{particle_ensemble_forward.1} parent=23 // pred_check
            _
          $region26: #{particle_ensemble_forward.1} parent=23 // pred_check_branch
            %197 = sbr.rel (0) target = $region28
          $region27: #{particle_ensemble_forward.1} parent=23 // pred_region
            // Predicated region
            $region29: #{particle_ensemble_forward.1} parent=27 // pred_check
              _
            $region30: #{particle_ensemble_forward.1} parent=27 // pred_check_branch
              %199 = sbr.rel (0) target = $region32
            $region31: #{particle_ensemble_forward.1} parent=27 // pred_region
              // Predicated region
              $region44: #{particle_ensemble_forward.1} parent=31 // pred_check
                _
              $region45: #{particle_ensemble_forward.1} parent=31 // pred_check_branch
                %217 = sbr.rel (0) target = $region47
              $region46: #{particle_ensemble_forward.1} parent=31 // pred_region
                loop: start=0, step=1, limit=1
                $region48: #{particle_ensemble_forward.1} parent=46 // loop_pre_header
                  _
                $region49: #{particle_ensemble_forward.1} parent=46 // loop_header
                  %s219 = sphi 0, %s223
                  %p220 = scmp.ge.s32.totalorder %s219, 1
                  %s224 = sphi %s195, %s195
                  %s225 = sphi %s193, %s193
                $region50: #{particle_ensemble_forward.1} parent=46 // loop_header_branch
                  %222 = sbr.rel (%p220) target = $region54
                $region51: #{particle_ensemble_forward.1} parent=46 // loop_body
                  %v226 = vld [vmem:[%s224] sm:$0xff]
                  %227 = vst [vmem:[%s225] sm:$0xff] %v226
                  %v228 = vld [vmem:[%s224 + $0x10] sm:$0xff]
                  %229 = vst [vmem:[%s225 + $0x8] sm:$0xff] %v228
                $region52: #{particle_ensemble_forward.1} parent=46 // loop_footer
                  %s223 = sadd.s32 1, %s219
                $region53: #{particle_ensemble_forward.1} parent=46 // loop_footer_branch
                  %218 = sbr.rel target = $region49
                $region54: #{particle_ensemble_forward.1} parent=46 // loop_exit
                  _
              $region47: #{particle_ensemble_forward.1} parent=31 // pred_fallthru
                _
              // Predicated region
              $region55: #{particle_ensemble_forward.1} parent=31 // pred_check
                _
              $region56: #{particle_ensemble_forward.1} parent=31 // pred_check_branch
                %231 = sbr.rel target = $region58
              $region57: #{particle_ensemble_forward.1} parent=31 // pred_region
                _
              $region58: #{particle_ensemble_forward.1} parent=31 // pred_fallthru
                _
            $region32: #{particle_ensemble_forward.1} parent=27 // pred_fallthru
              _
            // Predicated region
            $region33: #{particle_ensemble_forward.1} parent=27 // pred_check
              _
            $region34: #{particle_ensemble_forward.1} parent=27 // pred_check_branch
              %201 = sbr.rel target = $region36
            $region35: #{particle_ensemble_forward.1} parent=27 // pred_region
              %s203 = ssub.s32 256, 1
              loop: start=0, step=1, limit=1
              $region37: #{particle_ensemble_forward.1} parent=35 // loop_pre_header
                _
              $region38: #{particle_ensemble_forward.1} parent=35 // loop_header
                %s205 = sphi 0, %s209
                %p206 = scmp.ge.s32.totalorder %s205, 1
                %s210 = sphi %s195, %s195
                %s211 = sphi %s193, %s193
              $region39: #{particle_ensemble_forward.1} parent=35 // loop_header_branch
                %208 = sbr.rel (%p206) target = $region43
              $region40: #{particle_ensemble_forward.1} parent=35 // loop_body
                %v212 = vld [vmem:[%s210] sm:%s203]
                %213 = vst [vmem:[%s211] sm:%s203] %v212
                %v214 = vld [vmem:[%s210 + $0x10] sm:%s203]
                %215 = vst [vmem:[%s211 + $0x8] sm:%s203] %v214
              $region41: #{particle_ensemble_forward.1} parent=35 // loop_footer
                %s209 = sadd.s32 1, %s205
              $region42: #{particle_ensemble_forward.1} parent=35 // loop_footer_branch
                %204 = sbr.rel target = $region38
              $region43: #{particle_ensemble_forward.1} parent=35 // loop_exit
                _
            $region36: #{particle_ensemble_forward.1} parent=27 // pred_fallthru
              _
          $region28: #{particle_ensemble_forward.1} parent=23 // pred_fallthru
            _
          %232 = vnop
        $region24: #{particle_ensemble_forward.1} parent=19 // pred_fallthru
          _
        // Predicated region
        $region59: #{particle_ensemble_forward.1} parent=19 // pred_check
          %p233 = pneg %p81
        $region60: #{particle_ensemble_forward.1} parent=19 // pred_check_branch
          %235 = sbr.rel (%p233) target = $region62
        $region61: #{particle_ensemble_forward.1} parent=19 // pred_region
          %p236 = scmp.lt.s32.totalorder %s14, 1
          %s237 = scalar_select %p236, %s14, 1
          %s238 = scalar_lea.vmem %s2, %s237
        $region62: #{particle_ensemble_forward.1} parent=19 // pred_fallthru
          _
        // Predicated region
        $region63: #{particle_ensemble_forward.1} parent=19 // pred_check
          %p239 = pneg %p107
        $region64: #{particle_ensemble_forward.1} parent=19 // pred_check_branch
          %241 = sbr.rel (%p239) target = $region66
        $region65: #{particle_ensemble_forward.1} parent=19 // pred_region
          %s242 = sand.u32 %s97, 1
          %s243 = scalar_lea.sflag [#allocation4], %s242
          %s244 = sand.u32 %s97, 1
          %s245 = smul.addr %s244, 512
          %s246 = scalar_lea.vmem [#allocation3], %s245
          %s248 = ssub.s32 8192, 8192
          %249 = vsyncadd %s243, %s248
          %s250 = smul.addr %s14, 64
          %s251 = smul.addr %s250, 128
          %s252 = scalar_lea.hbm %s3, %s251
          %s253 = sshll.u32 %s246, 4
          %s254 = int_to_ptr.vmem [resolvable:$true] %s253
          %259 = dma.hbm_to_vmem [thread:$0]  %s252, 8192, %s254, %s243, 512, 512, 32
        $region66: #{particle_ensemble_forward.1} parent=19 // pred_fallthru
          _
        // Predicated region
        $region67: #{particle_ensemble_forward.1} parent=19 // pred_check
          %p260 = pneg %p133
        $region68: #{particle_ensemble_forward.1} parent=19 // pred_check_branch
          %262 = sbr.rel (%p260) target = $region70
        $region69: #{particle_ensemble_forward.1} parent=19 // pred_region
          %p263 = scmp.lt.s32.totalorder %s14, 1
          %s264 = scalar_select %p263, %s14, 1
          %s265 = smul.addr %s264, 4
          %s266 = scalar_lea.vmem %s4, %s265
        $region70: #{particle_ensemble_forward.1} parent=19 // pred_fallthru
          _
      $region20: #{particle_ensemble_forward.1} parent=5 // pred_fallthru
        _
      %p267 = scmp.le.s32.totalorder 1, %s14
      %p268 = scmp.lt.s32.totalorder %s14, 3
      %p269 = pnand %p267, %p268
      %p270 = pneg %p269
      // Predicated region
      $region71: #{particle_ensemble_forward.1} parent=5 // pred_check
        _
      $region72: #{particle_ensemble_forward.1} parent=5 // pred_check_branch
        %272 = sbr.rel (%p269) target = $region74
      $region73: #{particle_ensemble_forward.1} parent=5 // pred_region
        %s273 = ssub.s32 %s14, 1
        %s274 = sand.u32 %s48, 1
        %s275 = sand.u32 %s48, 1
        %s276 = smul.addr %s275, 16
        %s277 = scalar_lea.vmem [#allocation2], %s276
        // Predicated region
        $region75: #{particle_ensemble_forward.1} parent=73 // pred_check
          %p278 = pneg %p61
        $region76: #{particle_ensemble_forward.1} parent=73 // pred_check_branch
          %280 = sbr.rel (%p278) target = $region78
        $region77: #{particle_ensemble_forward.1} parent=73 // pred_region
          _
        $region78: #{particle_ensemble_forward.1} parent=73 // pred_fallthru
          _
        %s281 = sand.u32 %s100, 1
        %s282 = scalar_lea.sflag [#allocation4], %s281
        %s283 = sand.u32 %s100, 1
        %s284 = smul.addr %s283, 512
        %s285 = scalar_lea.vmem [#allocation3], %s284
        // Predicated region
        $region79: #{particle_ensemble_forward.1} parent=73 // pred_check
          %p286 = pneg %p113
        $region80: #{particle_ensemble_forward.1} parent=73 // pred_check_branch
          %288 = sbr.rel (%p286) target = $region82
        $region81: #{particle_ensemble_forward.1} parent=73 // pred_region
          %289 = dma.done %s282, 8192
        $region82: #{particle_ensemble_forward.1} parent=73 // pred_fallthru
          _
        %p290 = pneg %p35
        %p291 = pneg %p32
        %s292 = sand.u32 %s48, 1
        %s293 = sand.u32 %s48, 1
        %s294 = smul.addr %s293, 16
        %s295 = scalar_lea.vmem [#allocation2], %s294
        %p296 = pneg %p61
        %p297 = pneg %p58
        %p298 = scmp.lt.s32.totalorder %s19, 1
        %s299 = scalar_select %p298, %s19, 1
        %s300 = scalar_lea.vmem %s2, %s299
        %p301 = pneg %p87
        %p302 = pneg %p84
        %s303 = sand.u32 %s100, 1
        %s304 = scalar_lea.sflag [#allocation4], %s303
        %s305 = sand.u32 %s100, 1
        %s306 = smul.addr %s305, 512
        %s307 = scalar_lea.vmem [#allocation3], %s306
        %p308 = pneg %p113
        %p309 = pneg %p110
        %p310 = scmp.lt.s32.totalorder %s19, 1
        %s311 = scalar_select %p310, %s19, 1
        %s312 = smul.addr %s311, 4
        %s313 = scalar_lea.vmem %s4, %s312
        %p314 = pneg %p139
        %p315 = pneg %p136
        %p316 = pneg %p165
        %p317 = pneg %p162
        %s318 = sand.u32 %s152, 1
        %s319 = sand.u32 %s152, 1
        %s320 = smul.addr %s319, 512
        %s321 = scalar_lea.vmem [#allocation5], %s320
        %p322 = scmp.lt.s32.totalorder %s19, 1
        %s323 = scalar_select %p322, %s19, 1
        %s324 = scalar_lea.vmem %s2, %s323
        %p325 = scmp.lt.s32.totalorder %s19, 1
        %s326 = scalar_select %p325, %s19, 1
        %s327 = smul.addr %s326, 4
        %s328 = scalar_lea.vmem %s4, %s327
        %s329 = smul.u32 4, %s19
        %v330 = vld [vmem:[%s0] sm:$0xff]
        %v331 = vld [vmem:[%s0 + $0x8] sm:$0xff]
        %v332 = vld [vmem:[%s0 + $0x10] sm:$0xff]
        %v333 = vld [vmem:[%s0 + $0x18] sm:$0xff]
        %v334 = vld [vmem:[%s0 + $0x20] sm:$0xff]
        %v335 = vld [vmem:[%s0 + $0x28] sm:$0xff]
        %v336 = vld [vmem:[%s0 + $0x30] sm:$0xff]
        %v337 = vld [vmem:[%s0 + $0x38] sm:$0xff]
        %v338 = vld [vmem:[%s0 + $0x40] sm:$0xff]
        %v339 = vld [vmem:[%s0 + $0x48] sm:$0xff]
        %v340 = vld [vmem:[%s0 + $0x50] sm:$0xff]
        %v341 = vld [vmem:[%s0 + $0x58] sm:$0xff]
        %v342 = vld [vmem:[%s0 + $0x60] sm:$0xff]
        %v343 = vld [vmem:[%s0 + $0x68] sm:$0xff]
        %v344 = vld [vmem:[%s0 + $0x70] sm:$0xff]
        %v345 = vld [vmem:[%s0 + $0x78] sm:$0xff]
        %v346 = vld [vmem:[%s277] sm:$0xff]
        %v347 = vld [vmem:[%s277 + $0x8] sm:$0xff]
        %v348 = vld [vmem:[%s324] sm:$0x1]
        %v350 = vlaneseq
        %v351 = vshrl.u32 %v350, 7
        %v352 = vsub.s32 0, %v351
        %v353 = vrot.slane %v348, %v352
        %vm355 = vcmask 130048
        %v357 = vsel %vm355, %v330, 0
        %v360 = vsel %vm355, %v331, 0
        %v363 = vsel %vm355, %v332, 0
        %v366 = vsel %vm355, %v333, 0
        %v369 = vsel %vm355, %v334, 0
        %v372 = vsel %vm355, %v335, 0
        %v375 = vsel %vm355, %v336, 0
        %v378 = vsel %vm355, %v337, 0
        %v381 = vsel %vm355, %v338, 0
        %v384 = vsel %vm355, %v339, 0
        %v387 = vsel %vm355, %v340, 0
        %v390 = vsel %vm355, %v341, 0
        %v393 = vsel %vm355, %v342, 0
        %v396 = vsel %vm355, %v343, 0
        %v399 = vsel %vm355, %v344, 0
        %v402 = vsel %vm355, %v345, 0
        %404 = vmatprep.subr.mxu0 0.0
        %405 = vmatpush1.msra.mxu0 0.0
        %406 = vmatprep.subr.mxu0 0.0
        %407 = vmatpush1.msra.mxu0 0.0
        %408 = vmatprep.subr.mxu0 0.0
        %409 = vmatpush1.msra.mxu0 0.0
        %410 = vmatprep.subr.mxu0 0.0
        %411 = vmatpush1.msra.mxu0 0.0
        %412 = vmatprep.subr.mxu0 0.0
        %413 = vmatpush1.msra.mxu0 0.0
        %414 = vmatprep.subr.mxu0 0.0
        %415 = vmatpush1.msra.mxu0 0.0
        %416 = vmatprep.subr.mxu0 0.0
        %417 = vmatpush1.msra.mxu0 0.0
        %418 = vmatprep.subr.mxu0 0.0
        %419 = vmatpush1.msra.mxu0 0.0
        %420 = vmatprep.subr.mxu0 0.0
        %421 = vmatpush1.msra.mxu0 0.0
        %422 = vmatprep.subr.mxu0 0.0
        %423 = vmatpush1.msra.mxu0 0.0
        %424 = vmatprep.subr.mxu0 0.0
        %425 = vmatpush1.msra.mxu0 0.0
        %426 = vmatprep.subr.mxu0 0.0
        %427 = vmatpush1.msra.mxu0 0.0
        %428 = vmatprep.subr.mxu0 0.0
        %429 = vmatpush1.msra.mxu0 0.0
        %430 = vmatprep.subr.mxu0 0.0
        %431 = vmatpush1.msra.mxu0 0.0
        %432 = vmatprep.subr.mxu0 0.0
        %433 = vmatpush1.msra.mxu0 %v347
        %434 = vmatprep.subr.mxu0 0.0
        %435 = vmatpush1.msra.mxu0 %v346
        %436 = vmatprep.subr.mxu0 0.0
        %437 = vmatpush2.msra.mxu0 0.0
        %438 = vmatprep.subr.mxu0 0.0
        %439 = vmatpush2.msra.mxu0 0.0
        %440 = vmatprep.subr.mxu0 0.0
        %441 = vmatpush2.msra.mxu0 0.0
        %442 = vmatprep.subr.mxu0 0.0
        %443 = vmatpush2.msra.mxu0 0.0
        %444 = vmatprep.subr.mxu0 0.0
        %445 = vmatpush2.msra.mxu0 0.0
        %446 = vmatprep.subr.mxu0 0.0
        %447 = vmatpush2.msra.mxu0 0.0
        %448 = vmatprep.subr.mxu0 0.0
        %449 = vmatpush2.msra.mxu0 0.0
        %450 = vmatprep.subr.mxu0 0.0
        %451 = vmatpush2.msra.mxu0 0.0
        %452 = vmatprep.subr.mxu0 0.0
        %453 = vmatpush2.msra.mxu0 0.0
        %454 = vmatprep.subr.mxu0 0.0
        %455 = vmatpush2.msra.mxu0 0.0
        %456 = vmatprep.subr.mxu0 0.0
        %457 = vmatpush2.msra.mxu0 0.0
        %458 = vmatprep.subr.mxu0 0.0
        %459 = vmatpush2.msra.mxu0 0.0
        %460 = vmatprep.subr.mxu0 0.0
        %461 = vmatpush2.msra.mxu0 0.0
        %462 = vmatprep.subr.mxu0 0.0
        %463 = vmatpush2.msra.mxu0 0.0
        %464 = vmatprep.subr.mxu0 0.0
        %465 = vmatpush2.msra.mxu0 0.0
        %466 = vmatprep.subr.mxu0 0.0
        %467 = vmatpush2.msra.mxu0 0.0
        %468 = vmatprep.mubr.f32.mxu0 0.0
        %469 = vmatmul.mubr.f32.gmra.mxu0 %v357
        %v470 = vpop.f32.mrf.mxu0
        %v471 = vadd.f32 %v353, %v470
        %v472 = vpop.f32.mrf.mxu0
        %473 = vmatprep.mubr.f32.mxu0 0.0
        %474 = vmatmul.mubr.f32.gmra.mxu0 %v360
        %v475 = vpop.f32.mrf.mxu0
        %v476 = vadd.f32 %v353, %v475
        %v477 = vpop.f32.mrf.mxu0
        %478 = vmatprep.mubr.f32.mxu0 0.0
        %479 = vmatmul.mubr.f32.gmra.mxu0 %v363
        %v480 = vpop.f32.mrf.mxu0
        %v481 = vadd.f32 %v353, %v480
        %v482 = vpop.f32.mrf.mxu0
        %483 = vmatprep.mubr.f32.mxu0 0.0
        %484 = vmatmul.mubr.f32.gmra.mxu0 %v366
        %v485 = vpop.f32.mrf.mxu0
        %v486 = vadd.f32 %v353, %v485
        %v487 = vpop.f32.mrf.mxu0
        %488 = vmatprep.mubr.f32.mxu0 0.0
        %489 = vmatmul.mubr.f32.gmra.mxu0 %v369
        %v490 = vpop.f32.mrf.mxu0
        %v491 = vadd.f32 %v353, %v490
        %v492 = vpop.f32.mrf.mxu0
        %493 = vmatprep.mubr.f32.mxu0 0.0
        %494 = vmatmul.mubr.f32.gmra.mxu0 %v372
        %v495 = vpop.f32.mrf.mxu0
        %v496 = vadd.f32 %v353, %v495
        %v497 = vpop.f32.mrf.mxu0
        %498 = vmatprep.mubr.f32.mxu0 0.0
        %499 = vmatmul.mubr.f32.gmra.mxu0 %v375
        %v500 = vpop.f32.mrf.mxu0
        %v501 = vadd.f32 %v353, %v500
        %v502 = vpop.f32.mrf.mxu0
        %503 = vmatprep.mubr.f32.mxu0 0.0
        %504 = vmatmul.mubr.f32.gmra.mxu0 %v378
        %v505 = vpop.f32.mrf.mxu0
        %v506 = vadd.f32 %v353, %v505
        %v507 = vpop.f32.mrf.mxu0
        %508 = vmatprep.mubr.f32.mxu0 0.0
        %509 = vmatmul.mubr.f32.gmra.mxu0 %v381
        %v510 = vpop.f32.mrf.mxu0
        %v511 = vadd.f32 %v353, %v510
        %v512 = vpop.f32.mrf.mxu0
        %513 = vmatprep.mubr.f32.mxu0 0.0
        %514 = vmatmul.mubr.f32.gmra.mxu0 %v384
        %v515 = vpop.f32.mrf.mxu0
        %v516 = vadd.f32 %v353, %v515
        %v517 = vpop.f32.mrf.mxu0
        %518 = vmatprep.mubr.f32.mxu0 0.0
        %519 = vmatmul.mubr.f32.gmra.mxu0 %v387
        %v520 = vpop.f32.mrf.mxu0
        %v521 = vadd.f32 %v353, %v520
        %v522 = vpop.f32.mrf.mxu0
        %523 = vmatprep.mubr.f32.mxu0 0.0
        %524 = vmatmul.mubr.f32.gmra.mxu0 %v390
        %v525 = vpop.f32.mrf.mxu0
        %v526 = vadd.f32 %v353, %v525
        %v527 = vpop.f32.mrf.mxu0
        %528 = vmatprep.mubr.f32.mxu0 0.0
        %529 = vmatmul.mubr.f32.gmra.mxu0 %v393
        %v530 = vpop.f32.mrf.mxu0
        %v531 = vadd.f32 %v353, %v530
        %v532 = vpop.f32.mrf.mxu0
        %533 = vmatprep.mubr.f32.mxu0 0.0
        %534 = vmatmul.mubr.f32.gmra.mxu0 %v396
        %v535 = vpop.f32.mrf.mxu0
        %v536 = vadd.f32 %v353, %v535
        %v537 = vpop.f32.mrf.mxu0
        %538 = vmatprep.mubr.f32.mxu0 0.0
        %539 = vmatmul.mubr.f32.gmra.mxu0 %v399
        %v540 = vpop.f32.mrf.mxu0
        %v541 = vadd.f32 %v353, %v540
        %v542 = vpop.f32.mrf.mxu0
        %543 = vmatprep.mubr.f32.mxu0 0.0
        %544 = vmatmul.mubr.f32.gmra.mxu0 %v402
        %v545 = vpop.f32.mrf.mxu0
        %v546 = vadd.f32 %v353, %v545
        %v547 = vpop.f32.mrf.mxu0
        %548 = vdwg.mxu0
        %v549 = vmax.f32 %v471, 0.0
        %v550 = vmax.f32 %v476, 0.0
        %v551 = vmax.f32 %v481, 0.0
        %v552 = vmax.f32 %v486, 0.0
        %v553 = vmax.f32 %v491, 0.0
        %v554 = vmax.f32 %v496, 0.0
        %v555 = vmax.f32 %v501, 0.0
        %v556 = vmax.f32 %v506, 0.0
        %v557 = vmax.f32 %v511, 0.0
        %v558 = vmax.f32 %v516, 0.0
        %v559 = vmax.f32 %v521, 0.0
        %v560 = vmax.f32 %v526, 0.0
        %v561 = vmax.f32 %v531, 0.0
        %v562 = vmax.f32 %v536, 0.0
        %v563 = vmax.f32 %v541, 0.0
        %v564 = vmax.f32 %v546, 0.0
        %v565 = vld [vmem:[%s285] sm:$0xff]
        %v566 = vld [vmem:[%s285 + $0x8] sm:$0xff]
        %v567 = vld [vmem:[%s285 + $0x10] sm:$0xff]
        %v568 = vld [vmem:[%s285 + $0x18] sm:$0xff]
        %v569 = vld [vmem:[%s285 + $0x20] sm:$0xff]
        %v570 = vld [vmem:[%s285 + $0x28] sm:$0xff]
        %v571 = vld [vmem:[%s285 + $0x30] sm:$0xff]
        %v572 = vld [vmem:[%s285 + $0x38] sm:$0xff]
        %v573 = vld [vmem:[%s285 + $0x40] sm:$0xff]
        %v574 = vld [vmem:[%s285 + $0x48] sm:$0xff]
        %v575 = vld [vmem:[%s285 + $0x50] sm:$0xff]
        %v576 = vld [vmem:[%s285 + $0x58] sm:$0xff]
        %v577 = vld [vmem:[%s285 + $0x60] sm:$0xff]
        %v578 = vld [vmem:[%s285 + $0x68] sm:$0xff]
        %v579 = vld [vmem:[%s285 + $0x70] sm:$0xff]
        %v580 = vld [vmem:[%s285 + $0x78] sm:$0xff]
        %v581 = vld [vmem:[%s285 + $0x80] sm:$0xff]
        %v582 = vld [vmem:[%s285 + $0x88] sm:$0xff]
        %v583 = vld [vmem:[%s285 + $0x90] sm:$0xff]
        %v584 = vld [vmem:[%s285 + $0x98] sm:$0xff]
        %v585 = vld [vmem:[%s285 + $0xa0] sm:$0xff]
        %v586 = vld [vmem:[%s285 + $0xa8] sm:$0xff]
        %v587 = vld [vmem:[%s285 + $0xb0] sm:$0xff]
        %v588 = vld [vmem:[%s285 + $0xb8] sm:$0xff]
        %v589 = vld [vmem:[%s285 + $0xc0] sm:$0xff]
        %v590 = vld [vmem:[%s285 + $0xc8] sm:$0xff]
        %v591 = vld [vmem:[%s285 + $0xd0] sm:$0xff]
        %v592 = vld [vmem:[%s285 + $0xd8] sm:$0xff]
        %v593 = vld [vmem:[%s285 + $0xe0] sm:$0xff]
        %v594 = vld [vmem:[%s285 + $0xe8] sm:$0xff]
        %v595 = vld [vmem:[%s285 + $0xf0] sm:$0xff]
        %v596 = vld [vmem:[%s285 + $0xf8] sm:$0xff]
        %v597 = vld [vmem:[%s285 + $0x100] sm:$0xff]
        %v598 = vld [vmem:[%s285 + $0x108] sm:$0xff]
        %v599 = vld [vmem:[%s285 + $0x110] sm:$0xff]
        %v600 = vld [vmem:[%s285 + $0x118] sm:$0xff]
        %v601 = vld [vmem:[%s285 + $0x120] sm:$0xff]
        %v602 = vld [vmem:[%s285 + $0x128] sm:$0xff]
        %v603 = vld [vmem:[%s285 + $0x130] sm:$0xff]
        %v604 = vld [vmem:[%s285 + $0x138] sm:$0xff]
        %v605 = vld [vmem:[%s285 + $0x140] sm:$0xff]
        %v606 = vld [vmem:[%s285 + $0x148] sm:$0xff]
        %v607 = vld [vmem:[%s285 + $0x150] sm:$0xff]
        %v608 = vld [vmem:[%s285 + $0x158] sm:$0xff]
        %v609 = vld [vmem:[%s285 + $0x160] sm:$0xff]
        %v610 = vld [vmem:[%s285 + $0x168] sm:$0xff]
        %v611 = vld [vmem:[%s285 + $0x170] sm:$0xff]
        %v612 = vld [vmem:[%s285 + $0x178] sm:$0xff]
        %v613 = vld [vmem:[%s285 + $0x180] sm:$0xff]
        %v614 = vld [vmem:[%s285 + $0x188] sm:$0xff]
        %v615 = vld [vmem:[%s285 + $0x190] sm:$0xff]
        %v616 = vld [vmem:[%s285 + $0x198] sm:$0xff]
        %v617 = vld [vmem:[%s285 + $0x1a0] sm:$0xff]
        %v618 = vld [vmem:[%s285 + $0x1a8] sm:$0xff]
        %v619 = vld [vmem:[%s285 + $0x1b0] sm:$0xff]
        %v620 = vld [vmem:[%s285 + $0x1b8] sm:$0xff]
        %v621 = vld [vmem:[%s285 + $0x1c0] sm:$0xff]
        %v622 = vld [vmem:[%s285 + $0x1c8] sm:$0xff]
        %v623 = vld [vmem:[%s285 + $0x1d0] sm:$0xff]
        %v624 = vld [vmem:[%s285 + $0x1d8] sm:$0xff]
        %v625 = vld [vmem:[%s285 + $0x1e0] sm:$0xff]
        %v626 = vld [vmem:[%s285 + $0x1e8] sm:$0xff]
        %v627 = vld [vmem:[%s285 + $0x1f0] sm:$0xff]
        %v628 = vld [vmem:[%s285 + $0x1f8] sm:$0xff]
        %v629 = vld [vmem:[%s328] sm:$0xf]
        %v631 = vlaneseq
        %v632 = vshrl.u32 %v631, 7
        %v633 = vsub.s32 0, %v632
        %v634 = vrot.slane %v629, %v633
        %v635 = vlaneseq
        %v636 = vshrl.u32 %v635, 7
        %v637 = vsub.s32 1, %v636
        %v638 = vrot.slane %v629, %v637
        %v639 = vlaneseq
        %v640 = vshrl.u32 %v639, 7
        %v641 = vsub.s32 2, %v640
        %v642 = vrot.slane %v629, %v641
        %v643 = vlaneseq
        %v644 = vshrl.u32 %v643, 7
        %v645 = vsub.s32 3, %v644
        %v646 = vrot.slane %v629, %v645
        %651 = vmatprep.subr.mxu0 %v626
        %652 = vmatpush1.msra.mxu0 %v625
        %653 = vmatprep.subr.mxu0 %v622
        %654 = vmatpush1.msra.mxu0 %v621
        %655 = vmatprep.subr.mxu0 %v618
        %656 = vmatpush1.msra.mxu0 %v617
        %657 = vmatprep.subr.mxu0 %v614
        %658 = vmatpush1.msra.mxu0 %v613
        %659 = vmatprep.subr.mxu0 %v610
        %660 = vmatpush1.msra.mxu0 %v609
        %661 = vmatprep.subr.mxu0 %v606
        %662 = vmatpush1.msra.mxu0 %v605
        %663 = vmatprep.subr.mxu0 %v602
        %664 = vmatpush1.msra.mxu0 %v601
        %665 = vmatprep.subr.mxu0 %v598
        %666 = vmatpush1.msra.mxu0 %v597
        %667 = vmatprep.subr.mxu0 %v594
        %668 = vmatpush1.msra.mxu0 %v593
        %669 = vmatprep.subr.mxu0 %v590
        %670 = vmatpush1.msra.mxu0 %v589
        %671 = vmatprep.subr.mxu0 %v586
        %672 = vmatpush1.msra.mxu0 %v585
        %673 = vmatprep.subr.mxu0 %v582
        %674 = vmatpush1.msra.mxu0 %v581
        %675 = vmatprep.subr.mxu0 %v578
        %676 = vmatpush1.msra.mxu0 %v577
        %677 = vmatprep.subr.mxu0 %v574
        %678 = vmatpush1.msra.mxu0 %v573
        %679 = vmatprep.subr.mxu0 %v570
        %680 = vmatpush1.msra.mxu0 %v569
        %681 = vmatprep.subr.mxu0 %v566
        %682 = vmatpush1.msra.mxu0 %v565
        %683 = vmatprep.subr.mxu0 0.0
        %684 = vmatpush2.msra.mxu0 0.0
        %685 = vmatprep.subr.mxu0 0.0
        %686 = vmatpush2.msra.mxu0 0.0
        %687 = vmatprep.subr.mxu0 0.0
        %688 = vmatpush2.msra.mxu0 0.0
        %689 = vmatprep.subr.mxu0 0.0
        %690 = vmatpush2.msra.mxu0 0.0
        %691 = vmatprep.subr.mxu0 0.0
        %692 = vmatpush2.msra.mxu0 0.0
        %693 = vmatprep.subr.mxu0 0.0
        %694 = vmatpush2.msra.mxu0 0.0
        %695 = vmatprep.subr.mxu0 0.0
        %696 = vmatpush2.msra.mxu0 0.0
        %697 = vmatprep.subr.mxu0 0.0
        %698 = vmatpush2.msra.mxu0 0.0
        %699 = vmatprep.subr.mxu0 0.0
        %700 = vmatpush2.msra.mxu0 0.0
        %701 = vmatprep.subr.mxu0 0.0
        %702 = vmatpush2.msra.mxu0 0.0
        %703 = vmatprep.subr.mxu0 0.0
        %704 = vmatpush2.msra.mxu0 0.0
        %705 = vmatprep.subr.mxu0 0.0
        %706 = vmatpush2.msra.mxu0 0.0
        %707 = vmatprep.subr.mxu0 0.0
        %708 = vmatpush2.msra.mxu0 0.0
        %709 = vmatprep.subr.mxu0 0.0
        %710 = vmatpush2.msra.mxu0 0.0
        %711 = vmatprep.subr.mxu0 0.0
        %712 = vmatpush2.msra.mxu0 0.0
        %713 = vmatprep.subr.mxu0 0.0
        %714 = vmatpush2.msra.mxu0 0.0
        %715 = vmatprep.mubr.f32.mxu0 0.0
        %716 = vmatmul.mubr.f32.gmra.mxu0 %v549
        %v717 = vpop.f32.mrf.mxu0
        %v718 = vadd.f32 %v634, %v717
        %v719 = vpop.f32.mrf.mxu0
        %v720 = vadd.f32 %v638, %v719
        %721 = vmatprep.mubr.f32.mxu0 0.0
        %722 = vmatmul.mubr.f32.gmra.mxu0 %v550
        %v723 = vpop.f32.mrf.mxu0
        %v724 = vadd.f32 %v634, %v723
        %v725 = vpop.f32.mrf.mxu0
        %v726 = vadd.f32 %v638, %v725
        %727 = vmatprep.mubr.f32.mxu0 0.0
        %728 = vmatmul.mubr.f32.gmra.mxu0 %v551
        %v729 = vpop.f32.mrf.mxu0
        %v730 = vadd.f32 %v634, %v729
        %v731 = vpop.f32.mrf.mxu0
        %v732 = vadd.f32 %v638, %v731
        %733 = vmatprep.mubr.f32.mxu0 0.0
        %734 = vmatmul.mubr.f32.gmra.mxu0 %v552
        %v735 = vpop.f32.mrf.mxu0
        %v736 = vadd.f32 %v634, %v735
        %v737 = vpop.f32.mrf.mxu0
        %v738 = vadd.f32 %v638, %v737
        %739 = vmatprep.mubr.f32.mxu0 0.0
        %740 = vmatmul.mubr.f32.gmra.mxu0 %v553
        %v741 = vpop.f32.mrf.mxu0
        %v742 = vadd.f32 %v634, %v741
        %v743 = vpop.f32.mrf.mxu0
        %v744 = vadd.f32 %v638, %v743
        %745 = vmatprep.mubr.f32.mxu0 0.0
        %746 = vmatmul.mubr.f32.gmra.mxu0 %v554
        %v747 = vpop.f32.mrf.mxu0
        %v748 = vadd.f32 %v634, %v747
        %v749 = vpop.f32.mrf.mxu0
        %v750 = vadd.f32 %v638, %v749
        %751 = vmatprep.mubr.f32.mxu0 0.0
        %752 = vmatmul.mubr.f32.gmra.mxu0 %v555
        %v753 = vpop.f32.mrf.mxu0
        %v754 = vadd.f32 %v634, %v753
        %v755 = vpop.f32.mrf.mxu0
        %v756 = vadd.f32 %v638, %v755
        %757 = vmatprep.mubr.f32.mxu0 0.0
        %758 = vmatmul.mubr.f32.gmra.mxu0 %v556
        %v759 = vpop.f32.mrf.mxu0
        %v760 = vadd.f32 %v634, %v759
        %v761 = vpop.f32.mrf.mxu0
        %v762 = vadd.f32 %v638, %v761
        %763 = vmatprep.mubr.f32.mxu0 0.0
        %764 = vmatmul.mubr.f32.gmra.mxu0 %v557
        %v765 = vpop.f32.mrf.mxu0
        %v766 = vadd.f32 %v634, %v765
        %v767 = vpop.f32.mrf.mxu0
        %v768 = vadd.f32 %v638, %v767
        %769 = vmatprep.mubr.f32.mxu0 0.0
        %770 = vmatmul.mubr.f32.gmra.mxu0 %v558
        %v771 = vpop.f32.mrf.mxu0
        %v772 = vadd.f32 %v634, %v771
        %v773 = vpop.f32.mrf.mxu0
        %v774 = vadd.f32 %v638, %v773
        %775 = vmatprep.mubr.f32.mxu0 0.0
        %776 = vmatmul.mubr.f32.gmra.mxu0 %v559
        %v777 = vpop.f32.mrf.mxu0
        %v778 = vadd.f32 %v634, %v777
        %v779 = vpop.f32.mrf.mxu0
        %v780 = vadd.f32 %v638, %v779
        %781 = vmatprep.mubr.f32.mxu0 0.0
        %782 = vmatmul.mubr.f32.gmra.mxu0 %v560
        %v783 = vpop.f32.mrf.mxu0
        %v784 = vadd.f32 %v634, %v783
        %v785 = vpop.f32.mrf.mxu0
        %v786 = vadd.f32 %v638, %v785
        %787 = vmatprep.mubr.f32.mxu0 0.0
        %788 = vmatmul.mubr.f32.gmra.mxu0 %v561
        %v789 = vpop.f32.mrf.mxu0
        %v790 = vadd.f32 %v634, %v789
        %v791 = vpop.f32.mrf.mxu0
        %v792 = vadd.f32 %v638, %v791
        %793 = vmatprep.mubr.f32.mxu0 0.0
        %794 = vmatmul.mubr.f32.gmra.mxu0 %v562
        %v795 = vpop.f32.mrf.mxu0
        %v796 = vadd.f32 %v634, %v795
        %v797 = vpop.f32.mrf.mxu0
        %v798 = vadd.f32 %v638, %v797
        %799 = vmatprep.mubr.f32.mxu0 0.0
        %800 = vmatmul.mubr.f32.gmra.mxu0 %v563
        %v801 = vpop.f32.mrf.mxu0
        %v802 = vadd.f32 %v634, %v801
        %v803 = vpop.f32.mrf.mxu0
        %v804 = vadd.f32 %v638, %v803
        %805 = vmatprep.mubr.f32.mxu0 0.0
        %806 = vmatmul.mubr.f32.gmra.mxu0 %v564
        %v807 = vpop.f32.mrf.mxu0
        %v808 = vadd.f32 %v634, %v807
        %v809 = vpop.f32.mrf.mxu0
        %v810 = vadd.f32 %v638, %v809
        %811 = vdwg.mxu0
        %812 = vmatprep.subr.mxu0 %v628
        %813 = vmatpush1.msra.mxu0 %v627
        %814 = vmatprep.subr.mxu0 %v624
        %815 = vmatpush1.msra.mxu0 %v623
        %816 = vmatprep.subr.mxu0 %v620
        %817 = vmatpush1.msra.mxu0 %v619
        %818 = vmatprep.subr.mxu0 %v616
        %819 = vmatpush1.msra.mxu0 %v615
        %820 = vmatprep.subr.mxu0 %v612
        %821 = vmatpush1.msra.mxu0 %v611
        %822 = vmatprep.subr.mxu0 %v608
        %823 = vmatpush1.msra.mxu0 %v607
        %824 = vmatprep.subr.mxu0 %v604
        %825 = vmatpush1.msra.mxu0 %v603
        %826 = vmatprep.subr.mxu0 %v600
        %827 = vmatpush1.msra.mxu0 %v599
        %828 = vmatprep.subr.mxu0 %v596
        %829 = vmatpush1.msra.mxu0 %v595
        %830 = vmatprep.subr.mxu0 %v592
        %831 = vmatpush1.msra.mxu0 %v591
        %832 = vmatprep.subr.mxu0 %v588
        %833 = vmatpush1.msra.mxu0 %v587
        %834 = vmatprep.subr.mxu0 %v584
        %835 = vmatpush1.msra.mxu0 %v583
        %836 = vmatprep.subr.mxu0 %v580
        %837 = vmatpush1.msra.mxu0 %v579
        %838 = vmatprep.subr.mxu0 %v576
        %839 = vmatpush1.msra.mxu0 %v575
        %840 = vmatprep.subr.mxu0 %v572
        %841 = vmatpush1.msra.mxu0 %v571
        %842 = vmatprep.subr.mxu0 %v568
        %843 = vmatpush1.msra.mxu0 %v567
        %844 = vmatprep.subr.mxu0 0.0
        %845 = vmatpush2.msra.mxu0 0.0
        %846 = vmatprep.subr.mxu0 0.0
        %847 = vmatpush2.msra.mxu0 0.0
        %848 = vmatprep.subr.mxu0 0.0
        %849 = vmatpush2.msra.mxu0 0.0
        %850 = vmatprep.subr.mxu0 0.0
        %851 = vmatpush2.msra.mxu0 0.0
        %852 = vmatprep.subr.mxu0 0.0
        %853 = vmatpush2.msra.mxu0 0.0
        %854 = vmatprep.subr.mxu0 0.0
        %855 = vmatpush2.msra.mxu0 0.0
        %856 = vmatprep.subr.mxu0 0.0
        %857 = vmatpush2.msra.mxu0 0.0
        %858 = vmatprep.subr.mxu0 0.0
        %859 = vmatpush2.msra.mxu0 0.0
        %860 = vmatprep.subr.mxu0 0.0
        %861 = vmatpush2.msra.mxu0 0.0
        %862 = vmatprep.subr.mxu0 0.0
        %863 = vmatpush2.msra.mxu0 0.0
        %864 = vmatprep.subr.mxu0 0.0
        %865 = vmatpush2.msra.mxu0 0.0
        %866 = vmatprep.subr.mxu0 0.0
        %867 = vmatpush2.msra.mxu0 0.0
        %868 = vmatprep.subr.mxu0 0.0
        %869 = vmatpush2.msra.mxu0 0.0
        %870 = vmatprep.subr.mxu0 0.0
        %871 = vmatpush2.msra.mxu0 0.0
        %872 = vmatprep.subr.mxu0 0.0
        %873 = vmatpush2.msra.mxu0 0.0
        %874 = vmatprep.subr.mxu0 0.0
        %875 = vmatpush2.msra.mxu0 0.0
        %876 = vmatprep.mubr.f32.mxu0 0.0
        %877 = vmatmul.mubr.f32.gmra.mxu0 %v549
        %v878 = vpop.f32.mrf.mxu0
        %v879 = vadd.f32 %v642, %v878
        %v880 = vpop.f32.mrf.mxu0
        %v881 = vadd.f32 %v646, %v880
        %882 = vmatprep.mubr.f32.mxu0 0.0
        %883 = vmatmul.mubr.f32.gmra.mxu0 %v550
        %v884 = vpop.f32.mrf.mxu0
        %v885 = vadd.f32 %v642, %v884
        %v886 = vpop.f32.mrf.mxu0
        %v887 = vadd.f32 %v646, %v886
        %888 = vmatprep.mubr.f32.mxu0 0.0
        %889 = vmatmul.mubr.f32.gmra.mxu0 %v551
        %v890 = vpop.f32.mrf.mxu0
        %v891 = vadd.f32 %v642, %v890
        %v892 = vpop.f32.mrf.mxu0
        %v893 = vadd.f32 %v646, %v892
        %894 = vmatprep.mubr.f32.mxu0 0.0
        %895 = vmatmul.mubr.f32.gmra.mxu0 %v552
        %v896 = vpop.f32.mrf.mxu0
        %v897 = vadd.f32 %v642, %v896
        %v898 = vpop.f32.mrf.mxu0
        %v899 = vadd.f32 %v646, %v898
        %900 = vmatprep.mubr.f32.mxu0 0.0
        %901 = vmatmul.mubr.f32.gmra.mxu0 %v553
        %v902 = vpop.f32.mrf.mxu0
        %v903 = vadd.f32 %v642, %v902
        %v904 = vpop.f32.mrf.mxu0
        %v905 = vadd.f32 %v646, %v904
        %906 = vmatprep.mubr.f32.mxu0 0.0
        %907 = vmatmul.mubr.f32.gmra.mxu0 %v554
        %v908 = vpop.f32.mrf.mxu0
        %v909 = vadd.f32 %v642, %v908
        %v910 = vpop.f32.mrf.mxu0
        %v911 = vadd.f32 %v646, %v910
        %912 = vmatprep.mubr.f32.mxu0 0.0
        %913 = vmatmul.mubr.f32.gmra.mxu0 %v555
        %v914 = vpop.f32.mrf.mxu0
        %v915 = vadd.f32 %v642, %v914
        %v916 = vpop.f32.mrf.mxu0
        %v917 = vadd.f32 %v646, %v916
        %918 = vmatprep.mubr.f32.mxu0 0.0
        %919 = vmatmul.mubr.f32.gmra.mxu0 %v556
        %v920 = vpop.f32.mrf.mxu0
        %v921 = vadd.f32 %v642, %v920
        %v922 = vpop.f32.mrf.mxu0
        %v923 = vadd.f32 %v646, %v922
        %924 = vmatprep.mubr.f32.mxu0 0.0
        %925 = vmatmul.mubr.f32.gmra.mxu0 %v557
        %v926 = vpop.f32.mrf.mxu0
        %v927 = vadd.f32 %v642, %v926
        %v928 = vpop.f32.mrf.mxu0
        %v929 = vadd.f32 %v646, %v928
        %930 = vmatprep.mubr.f32.mxu0 0.0
        %931 = vmatmul.mubr.f32.gmra.mxu0 %v558
        %v932 = vpop.f32.mrf.mxu0
        %v933 = vadd.f32 %v642, %v932
        %v934 = vpop.f32.mrf.mxu0
        %v935 = vadd.f32 %v646, %v934
        %936 = vmatprep.mubr.f32.mxu0 0.0
        %937 = vmatmul.mubr.f32.gmra.mxu0 %v559
        %v938 = vpop.f32.mrf.mxu0
        %v939 = vadd.f32 %v642, %v938
        %v940 = vpop.f32.mrf.mxu0
        %v941 = vadd.f32 %v646, %v940
        %942 = vmatprep.mubr.f32.mxu0 0.0
        %943 = vmatmul.mubr.f32.gmra.mxu0 %v560
        %v944 = vpop.f32.mrf.mxu0
        %v945 = vadd.f32 %v642, %v944
        %v946 = vpop.f32.mrf.mxu0
        %v947 = vadd.f32 %v646, %v946
        %948 = vmatprep.mubr.f32.mxu0 0.0
        %949 = vmatmul.mubr.f32.gmra.mxu0 %v561
        %v950 = vpop.f32.mrf.mxu0
        %v951 = vadd.f32 %v642, %v950
        %v952 = vpop.f32.mrf.mxu0
        %v953 = vadd.f32 %v646, %v952
        %954 = vmatprep.mubr.f32.mxu0 0.0
        %955 = vmatmul.mubr.f32.gmra.mxu0 %v562
        %v956 = vpop.f32.mrf.mxu0
        %v957 = vadd.f32 %v642, %v956
        %v958 = vpop.f32.mrf.mxu0
        %v959 = vadd.f32 %v646, %v958
        %960 = vmatprep.mubr.f32.mxu0 0.0
        %961 = vmatmul.mubr.f32.gmra.mxu0 %v563
        %v962 = vpop.f32.mrf.mxu0
        %v963 = vadd.f32 %v642, %v962
        %v964 = vpop.f32.mrf.mxu0
        %v965 = vadd.f32 %v646, %v964
        %966 = vmatprep.mubr.f32.mxu0 0.0
        %967 = vmatmul.mubr.f32.gmra.mxu0 %v564
        %v968 = vpop.f32.mrf.mxu0
        %v969 = vadd.f32 %v642, %v968
        %v970 = vpop.f32.mrf.mxu0
        %v971 = vadd.f32 %v646, %v970
        %972 = vdwg.mxu0
        %973 = vst [vmem:[%s321] sm:$0xff] %v718
        %974 = vst [vmem:[%s321 + $0x8] sm:$0xff] %v720
        %975 = vst [vmem:[%s321 + $0x10] sm:$0xff] %v879
        %976 = vst [vmem:[%s321 + $0x18] sm:$0xff] %v881
        %977 = vst [vmem:[%s321 + $0x20] sm:$0xff] %v724
        %978 = vst [vmem:[%s321 + $0x28] sm:$0xff] %v726
        %979 = vst [vmem:[%s321 + $0x30] sm:$0xff] %v885
        %980 = vst [vmem:[%s321 + $0x38] sm:$0xff] %v887
        %981 = vst [vmem:[%s321 + $0x40] sm:$0xff] %v730
        %982 = vst [vmem:[%s321 + $0x48] sm:$0xff] %v732
        %983 = vst [vmem:[%s321 + $0x50] sm:$0xff] %v891
        %984 = vst [vmem:[%s321 + $0x58] sm:$0xff] %v893
        %985 = vst [vmem:[%s321 + $0x60] sm:$0xff] %v736
        %986 = vst [vmem:[%s321 + $0x68] sm:$0xff] %v738
        %987 = vst [vmem:[%s321 + $0x70] sm:$0xff] %v897
        %988 = vst [vmem:[%s321 + $0x78] sm:$0xff] %v899
        %989 = vst [vmem:[%s321 + $0x80] sm:$0xff] %v742
        %990 = vst [vmem:[%s321 + $0x88] sm:$0xff] %v744
        %991 = vst [vmem:[%s321 + $0x90] sm:$0xff] %v903
        %992 = vst [vmem:[%s321 + $0x98] sm:$0xff] %v905
        %993 = vst [vmem:[%s321 + $0xa0] sm:$0xff] %v748
        %994 = vst [vmem:[%s321 + $0xa8] sm:$0xff] %v750
        %995 = vst [vmem:[%s321 + $0xb0] sm:$0xff] %v909
        %996 = vst [vmem:[%s321 + $0xb8] sm:$0xff] %v911
        %997 = vst [vmem:[%s321 + $0xc0] sm:$0xff] %v754
        %998 = vst [vmem:[%s321 + $0xc8] sm:$0xff] %v756
        %999 = vst [vmem:[%s321 + $0xd0] sm:$0xff] %v915
        %1000 = vst [vmem:[%s321 + $0xd8] sm:$0xff] %v917
        %1001 = vst [vmem:[%s321 + $0xe0] sm:$0xff] %v760
        %1002 = vst [vmem:[%s321 + $0xe8] sm:$0xff] %v762
        %1003 = vst [vmem:[%s321 + $0xf0] sm:$0xff] %v921
        %1004 = vst [vmem:[%s321 + $0xf8] sm:$0xff] %v923
        %1005 = vst [vmem:[%s321 + $0x100] sm:$0xff] %v766
        %1006 = vst [vmem:[%s321 + $0x108] sm:$0xff] %v768
        %1007 = vst [vmem:[%s321 + $0x110] sm:$0xff] %v927
        %1008 = vst [vmem:[%s321 + $0x118] sm:$0xff] %v929
        %1009 = vst [vmem:[%s321 + $0x120] sm:$0xff] %v772
        %1010 = vst [vmem:[%s321 + $0x128] sm:$0xff] %v774
        %1011 = vst [vmem:[%s321 + $0x130] sm:$0xff] %v933
        %1012 = vst [vmem:[%s321 + $0x138] sm:$0xff] %v935
        %1013 = vst [vmem:[%s321 + $0x140] sm:$0xff] %v778
        %1014 = vst [vmem:[%s321 + $0x148] sm:$0xff] %v780
        %1015 = vst [vmem:[%s321 + $0x150] sm:$0xff] %v939
        %1016 = vst [vmem:[%s321 + $0x158] sm:$0xff] %v941
        %1017 = vst [vmem:[%s321 + $0x160] sm:$0xff] %v784
        %1018 = vst [vmem:[%s321 + $0x168] sm:$0xff] %v786
        %1019 = vst [vmem:[%s321 + $0x170] sm:$0xff] %v945
        %1020 = vst [vmem:[%s321 + $0x178] sm:$0xff] %v947
        %1021 = vst [vmem:[%s321 + $0x180] sm:$0xff] %v790
        %1022 = vst [vmem:[%s321 + $0x188] sm:$0xff] %v792
        %1023 = vst [vmem:[%s321 + $0x190] sm:$0xff] %v951
        %1024 = vst [vmem:[%s321 + $0x198] sm:$0xff] %v953
        %1025 = vst [vmem:[%s321 + $0x1a0] sm:$0xff] %v796
        %1026 = vst [vmem:[%s321 + $0x1a8] sm:$0xff] %v798
        %1027 = vst [vmem:[%s321 + $0x1b0] sm:$0xff] %v957
        %1028 = vst [vmem:[%s321 + $0x1b8] sm:$0xff] %v959
        %1029 = vst [vmem:[%s321 + $0x1c0] sm:$0xff] %v802
        %1030 = vst [vmem:[%s321 + $0x1c8] sm:$0xff] %v804
        %1031 = vst [vmem:[%s321 + $0x1d0] sm:$0xff] %v963
        %1032 = vst [vmem:[%s321 + $0x1d8] sm:$0xff] %v965
        %1033 = vst [vmem:[%s321 + $0x1e0] sm:$0xff] %v808
        %1034 = vst [vmem:[%s321 + $0x1e8] sm:$0xff] %v810
        %1035 = vst [vmem:[%s321 + $0x1f0] sm:$0xff] %v969
        %1036 = vst [vmem:[%s321 + $0x1f8] sm:$0xff] %v971
        %s1037 = sand.u32 %s152, 1
        %s1038 = sand.u32 %s152, 1
        %s1039 = smul.addr %s1038, 512
        %s1040 = scalar_lea.vmem [#allocation5], %s1039
        // Predicated region
        $region83: #{particle_ensemble_forward.1} parent=73 // pred_check
          %p1041 = pneg %p162
        $region84: #{particle_ensemble_forward.1} parent=73 // pred_check_branch
          %1043 = sbr.rel (%p1041) target = $region86
        $region85: #{particle_ensemble_forward.1} parent=73 // pred_region
          %s1044 = smul.u32 4, %s19
          %s1045 = smul.addr %s1044, 8
          %s1046 = scalar_lea.vmem %s5, %s1045
          // Predicated region
          $region87: #{particle_ensemble_forward.1} parent=85 // pred_check
            _
          $region88: #{particle_ensemble_forward.1} parent=85 // pred_check_branch
            %1048 = sbr.rel (0) target = $region90
          $region89: #{particle_ensemble_forward.1} parent=85 // pred_region
            // Predicated region
            $region91: #{particle_ensemble_forward.1} parent=89 // pred_check
              _
            $region92: #{particle_ensemble_forward.1} parent=89 // pred_check_branch
              %1050 = sbr.rel (0) target = $region94
            $region93: #{particle_ensemble_forward.1} parent=89 // pred_region
              loop: start=0, step=1, limit=1
              $region95: #{particle_ensemble_forward.1} parent=93 // loop_pre_header
                _
              $region96: #{particle_ensemble_forward.1} parent=93 // loop_header
                %s1052 = sphi 0, %s1056
                %p1053 = scmp.ge.s32.totalorder %s1052, 1
                %s1057 = sphi %s1040, %s1040
                %s1058 = sphi %s1046, %s1046
              $region97: #{particle_ensemble_forward.1} parent=93 // loop_header_branch
                %1055 = sbr.rel (%p1053) target = $region101
              $region98: #{particle_ensemble_forward.1} parent=93 // loop_body
                %v1059 = vld [vmem:[%s1057] sm:$0xff]
                %1060 = vst [vmem:[%s1058] sm:$0xff] %v1059
                %v1061 = vld [vmem:[%s1057 + $0x8] sm:$0xff]
                %1062 = vst [vmem:[%s1058 + $0x8] sm:$0xff] %v1061
                %v1063 = vld [vmem:[%s1057 + $0x10] sm:$0xff]
                %1064 = vst [vmem:[%s1058 + $0x10] sm:$0xff] %v1063
                %v1065 = vld [vmem:[%s1057 + $0x18] sm:$0xff]
                %1066 = vst [vmem:[%s1058 + $0x18] sm:$0xff] %v1065
                %v1067 = vld [vmem:[%s1057 + $0x20] sm:$0xff]
                %1068 = vst [vmem:[%s1058 + $0x40] sm:$0xff] %v1067
                %v1069 = vld [vmem:[%s1057 + $0x28] sm:$0xff]
                %1070 = vst [vmem:[%s1058 + $0x48] sm:$0xff] %v1069
                %v1071 = vld [vmem:[%s1057 + $0x30] sm:$0xff]
                %1072 = vst [vmem:[%s1058 + $0x50] sm:$0xff] %v1071
                %v1073 = vld [vmem:[%s1057 + $0x38] sm:$0xff]
                %1074 = vst [vmem:[%s1058 + $0x58] sm:$0xff] %v1073
                %v1075 = vld [vmem:[%s1057 + $0x40] sm:$0xff]
                %1076 = vst [vmem:[%s1058 + $0x80] sm:$0xff] %v1075
                %v1077 = vld [vmem:[%s1057 + $0x48] sm:$0xff]
                %1078 = vst [vmem:[%s1058 + $0x88] sm:$0xff] %v1077
                %v1079 = vld [vmem:[%s1057 + $0x50] sm:$0xff]
                %1080 = vst [vmem:[%s1058 + $0x90] sm:$0xff] %v1079
                %v1081 = vld [vmem:[%s1057 + $0x58] sm:$0xff]
                %1082 = vst [vmem:[%s1058 + $0x98] sm:$0xff] %v1081
                %v1083 = vld [vmem:[%s1057 + $0x60] sm:$0xff]
                %1084 = vst [vmem:[%s1058 + $0xc0] sm:$0xff] %v1083
                %v1085 = vld [vmem:[%s1057 + $0x68] sm:$0xff]
                %1086 = vst [vmem:[%s1058 + $0xc8] sm:$0xff] %v1085
                %v1087 = vld [vmem:[%s1057 + $0x70] sm:$0xff]
                %1088 = vst [vmem:[%s1058 + $0xd0] sm:$0xff] %v1087
                %v1089 = vld [vmem:[%s1057 + $0x78] sm:$0xff]
                %1090 = vst [vmem:[%s1058 + $0xd8] sm:$0xff] %v1089
                %v1091 = vld [vmem:[%s1057 + $0x80] sm:$0xff]
                %1092 = vst [vmem:[%s1058 + $0x100] sm:$0xff] %v1091
                %v1093 = vld [vmem:[%s1057 + $0x88] sm:$0xff]
                %1094 = vst [vmem:[%s1058 + $0x108] sm:$0xff] %v1093
                %v1095 = vld [vmem:[%s1057 + $0x90] sm:$0xff]
                %1096 = vst [vmem:[%s1058 + $0x110] sm:$0xff] %v1095
                %v1097 = vld [vmem:[%s1057 + $0x98] sm:$0xff]
                %1098 = vst [vmem:[%s1058 + $0x118] sm:$0xff] %v1097
                %v1099 = vld [vmem:[%s1057 + $0xa0] sm:$0xff]
                %1100 = vst [vmem:[%s1058 + $0x140] sm:$0xff] %v1099
                %v1101 = vld [vmem:[%s1057 + $0xa8] sm:$0xff]
                %1102 = vst [vmem:[%s1058 + $0x148] sm:$0xff] %v1101
                %v1103 = vld [vmem:[%s1057 + $0xb0] sm:$0xff]
                %1104 = vst [vmem:[%s1058 + $0x150] sm:$0xff] %v1103
                %v1105 = vld [vmem:[%s1057 + $0xb8] sm:$0xff]
                %1106 = vst [vmem:[%s1058 + $0x158] sm:$0xff] %v1105
                %v1107 = vld [vmem:[%s1057 + $0xc0] sm:$0xff]
                %1108 = vst [vmem:[%s1058 + $0x180] sm:$0xff] %v1107
                %v1109 = vld [vmem:[%s1057 + $0xc8] sm:$0xff]
                %1110 = vst [vmem:[%s1058 + $0x188] sm:$0xff] %v1109
                %v1111 = vld [vmem:[%s1057 + $0xd0] sm:$0xff]
                %1112 = vst [vmem:[%s1058 + $0x190] sm:$0xff] %v1111
                %v1113 = vld [vmem:[%s1057 + $0xd8] sm:$0xff]
                %1114 = vst [vmem:[%s1058 + $0x198] sm:$0xff] %v1113
                %v1115 = vld [vmem:[%s1057 + $0xe0] sm:$0xff]
                %1116 = vst [vmem:[%s1058 + $0x1c0] sm:$0xff] %v1115
                %v1117 = vld [vmem:[%s1057 + $0xe8] sm:$0xff]
                %1118 = vst [vmem:[%s1058 + $0x1c8] sm:$0xff] %v1117
                %v1119 = vld [vmem:[%s1057 + $0xf0] sm:$0xff]
                %1120 = vst [vmem:[%s1058 + $0x1d0] sm:$0xff] %v1119
                %v1121 = vld [vmem:[%s1057 + $0xf8] sm:$0xff]
                %1122 = vst [vmem:[%s1058 + $0x1d8] sm:$0xff] %v1121
                %v1123 = vld [vmem:[%s1057 + $0x100] sm:$0xff]
                %1124 = vst [vmem:[%s1058 + $0x200] sm:$0xff] %v1123
                %v1125 = vld [vmem:[%s1057 + $0x108] sm:$0xff]
                %1126 = vst [vmem:[%s1058 + $0x208] sm:$0xff] %v1125
                %v1127 = vld [vmem:[%s1057 + $0x110] sm:$0xff]
                %1128 = vst [vmem:[%s1058 + $0x210] sm:$0xff] %v1127
                %v1129 = vld [vmem:[%s1057 + $0x118] sm:$0xff]
                %1130 = vst [vmem:[%s1058 + $0x218] sm:$0xff] %v1129
                %v1131 = vld [vmem:[%s1057 + $0x120] sm:$0xff]
                %1132 = vst [vmem:[%s1058 + $0x240] sm:$0xff] %v1131
                %v1133 = vld [vmem:[%s1057 + $0x128] sm:$0xff]
                %1134 = vst [vmem:[%s1058 + $0x248] sm:$0xff] %v1133
                %v1135 = vld [vmem:[%s1057 + $0x130] sm:$0xff]
                %1136 = vst [vmem:[%s1058 + $0x250] sm:$0xff] %v1135
                %v1137 = vld [vmem:[%s1057 + $0x138] sm:$0xff]
                %1138 = vst [vmem:[%s1058 + $0x258] sm:$0xff] %v1137
                %v1139 = vld [vmem:[%s1057 + $0x140] sm:$0xff]
                %1140 = vst [vmem:[%s1058 + $0x280] sm:$0xff] %v1139
                %v1141 = vld [vmem:[%s1057 + $0x148] sm:$0xff]
                %1142 = vst [vmem:[%s1058 + $0x288] sm:$0xff] %v1141
                %v1143 = vld [vmem:[%s1057 + $0x150] sm:$0xff]
                %1144 = vst [vmem:[%s1058 + $0x290] sm:$0xff] %v1143
                %v1145 = vld [vmem:[%s1057 + $0x158] sm:$0xff]
                %1146 = vst [vmem:[%s1058 + $0x298] sm:$0xff] %v1145
                %v1147 = vld [vmem:[%s1057 + $0x160] sm:$0xff]
                %1148 = vst [vmem:[%s1058 + $0x2c0] sm:$0xff] %v1147
                %v1149 = vld [vmem:[%s1057 + $0x168] sm:$0xff]
                %1150 = vst [vmem:[%s1058 + $0x2c8] sm:$0xff] %v1149
                %v1151 = vld [vmem:[%s1057 + $0x170] sm:$0xff]
                %1152 = vst [vmem:[%s1058 + $0x2d0] sm:$0xff] %v1151
                %v1153 = vld [vmem:[%s1057 + $0x178] sm:$0xff]
                %1154 = vst [vmem:[%s1058 + $0x2d8] sm:$0xff] %v1153
                %v1155 = vld [vmem:[%s1057 + $0x180] sm:$0xff]
                %1156 = vst [vmem:[%s1058 + $0x300] sm:$0xff] %v1155
                %v1157 = vld [vmem:[%s1057 + $0x188] sm:$0xff]
                %1158 = vst [vmem:[%s1058 + $0x308] sm:$0xff] %v1157
                %v1159 = vld [vmem:[%s1057 + $0x190] sm:$0xff]
                %1160 = vst [vmem:[%s1058 + $0x310] sm:$0xff] %v1159
                %v1161 = vld [vmem:[%s1057 + $0x198] sm:$0xff]
                %1162 = vst [vmem:[%s1058 + $0x318] sm:$0xff] %v1161
                %v1163 = vld [vmem:[%s1057 + $0x1a0] sm:$0xff]
                %1164 = vst [vmem:[%s1058 + $0x340] sm:$0xff] %v1163
                %v1165 = vld [vmem:[%s1057 + $0x1a8] sm:$0xff]
                %1166 = vst [vmem:[%s1058 + $0x348] sm:$0xff] %v1165
                %v1167 = vld [vmem:[%s1057 + $0x1b0] sm:$0xff]
                %1168 = vst [vmem:[%s1058 + $0x350] sm:$0xff] %v1167
                %v1169 = vld [vmem:[%s1057 + $0x1b8] sm:$0xff]
                %1170 = vst [vmem:[%s1058 + $0x358] sm:$0xff] %v1169
                %v1171 = vld [vmem:[%s1057 + $0x1c0] sm:$0xff]
                %1172 = vst [vmem:[%s1058 + $0x380] sm:$0xff] %v1171
                %v1173 = vld [vmem:[%s1057 + $0x1c8] sm:$0xff]
                %1174 = vst [vmem:[%s1058 + $0x388] sm:$0xff] %v1173
                %v1175 = vld [vmem:[%s1057 + $0x1d0] sm:$0xff]
                %1176 = vst [vmem:[%s1058 + $0x390] sm:$0xff] %v1175
                %v1177 = vld [vmem:[%s1057 + $0x1d8] sm:$0xff]
                %1178 = vst [vmem:[%s1058 + $0x398] sm:$0xff] %v1177
                %v1179 = vld [vmem:[%s1057 + $0x1e0] sm:$0xff]
                %1180 = vst [vmem:[%s1058 + $0x3c0] sm:$0xff] %v1179
                %v1181 = vld [vmem:[%s1057 + $0x1e8] sm:$0xff]
                %1182 = vst [vmem:[%s1058 + $0x3c8] sm:$0xff] %v1181
                %v1183 = vld [vmem:[%s1057 + $0x1f0] sm:$0xff]
                %1184 = vst [vmem:[%s1058 + $0x3d0] sm:$0xff] %v1183
                %v1185 = vld [vmem:[%s1057 + $0x1f8] sm:$0xff]
                %1186 = vst [vmem:[%s1058 + $0x3d8] sm:$0xff] %v1185
              $region99: #{particle_ensemble_forward.1} parent=93 // loop_footer
                %s1056 = sadd.s32 1, %s1052
              $region100: #{particle_ensemble_forward.1} parent=93 // loop_footer_branch
                %1051 = sbr.rel target = $region96
              $region101: #{particle_ensemble_forward.1} parent=93 // loop_exit
                _
            $region94: #{particle_ensemble_forward.1} parent=89 // pred_fallthru
              _
            // Predicated region
            $region102: #{particle_ensemble_forward.1} parent=89 // pred_check
              _
            $region103: #{particle_ensemble_forward.1} parent=89 // pred_check_branch
              %1188 = sbr.rel target = $region105
            $region104: #{particle_ensemble_forward.1} parent=89 // pred_region
              _
            $region105: #{particle_ensemble_forward.1} parent=89 // pred_fallthru
              _
          $region90: #{particle_ensemble_forward.1} parent=85 // pred_fallthru
            _
          %1189 = vnop
        $region86: #{particle_ensemble_forward.1} parent=73 // pred_fallthru
          _
      $region74: #{particle_ensemble_forward.1} parent=5 // pred_fallthru
        _
      %p1190 = scmp.le.s32.totalorder 2, %s14
      // Predicated region
      $region106: #{particle_ensemble_forward.1} parent=5 // pred_check
        %p1191 = pneg %p1190
      $region107: #{particle_ensemble_forward.1} parent=5 // pred_check_branch
        %1193 = sbr.rel (%p1191) target = $region109
      $region108: #{particle_ensemble_forward.1} parent=5 // pred_region
        %s1194 = ssub.s32 %s14, 2
        // Predicated region
        $region110: #{particle_ensemble_forward.1} parent=108 // pred_check
          %p1195 = pneg %p168
        $region111: #{particle_ensemble_forward.1} parent=108 // pred_check_branch
          %1197 = sbr.rel (%p1195) target = $region113
        $region112: #{particle_ensemble_forward.1} parent=108 // pred_region
          %s1198 = sand.u32 %s153, 1
          %s1199 = sand.u32 %s153, 1
          %s1200 = smul.addr %s1199, 512
          %s1201 = scalar_lea.vmem [#allocation5], %s1200
        $region113: #{particle_ensemble_forward.1} parent=108 // pred_fallthru
          _
      $region109: #{particle_ensemble_forward.1} parent=5 // pred_fallthru
        _
    $region6: #{particle_ensemble_forward.1} parent=1 // loop_footer
      %s18 = sadd.s32 1, %s14
    $region7: #{particle_ensemble_forward.1} parent=1 // loop_footer_branch
      %13 = sbr.rel target = $region3
    $region8: #{particle_ensemble_forward.1} parent=1 // loop_exit
      _
    %1202 = vsyncpa [#allocation4], 1
    %s1203 = scalar_lea.sflag [#allocation4], 1
    %1204 = vsyncpa %s1203, 1

</llo_original>
